<compile_context>
chip_gen: v7x
topology: tpu7x:2x2x1
jax: 0.10.0
libtpu: 0.0.40
codegen_flags: <defaults>
</compile_context>

<pallas_src>
import functools

import jax
import jax.numpy as jnp
import numpy as np
from jax.experimental import pallas as pl
from jax.experimental.pallas import tpu as pltpu

N_DIM = 3
N_CLASSES = 2
N_STEPS = 200            # noise_scheduler.num_timesteps
TIME_EMBED_DIM = 128
LABEL_EMBED_DIM = 64
HIDDEN_DIM = 256
LN_EPS = 1e-5            # PyTorch nn.LayerNorm default

# Row layout of the packed (k, HIDDEN_DIM) vector bundle.
ROW_B1, ROW_G1, ROW_BE1 = 0, 1, 2
ROW_B2, ROW_G2, ROW_BE2 = 3, 4, 5
ROW_B3, ROW_G3, ROW_BE3 = 6, 7, 8
ROW_WX0 = 9                      # N_DIM rows of Wx (for VPU mul-adds)
ROW_EWE0 = ROW_WX0 + N_DIM       # N_CLASSES rows of (emb @ We)
VEC256_ROWS = ROW_EWE0 + N_CLASSES


def _round_up(n, m):
    return ((n + m - 1) // m) * m


def _layernorm(h, gamma, beta):
    # f32 statistics (kept f32 even when matmul operands are bf16).
    mu = jnp.mean(h, axis=-1, keepdims=True)
    var = jnp.mean((h - mu) ** 2, axis=-1, keepdims=True)
    return (h - mu) * jax.lax.rsqrt(var + LN_EPS) * gamma + beta


def ddpm_kernel(
    x_ref, tnorm_ref, yoh_ref,          # activations (batch-tiled)
    vec128_ref, vec256_ref,             # packed small vectors (f32, resident)
    wtw_ref, w2_ref, w3_ref, wo_ref,    # matmul weights (resident, f32 or bf16)
    bo_ref,                             # output bias (1, N_DIM)
    out_ref,
):
    f32 = jnp.float32
    mdt = wtw_ref.dtype   # matmul operand dtype (f32 or bf16)

    # --- time embedding layer 1: Linear(1,128)+ReLU as a VPU broadcast ---
    t = tnorm_ref[...]                              # (TM, 1)
    tw1 = vec128_ref[0:1, :]                        # (1, 128)
    tb1 = vec128_ref[1:2, :]                        # (1, 128)
    t_h = jnp.maximum(t * tw1 + tb1, 0.0)           # (TM, 128)

    # --- first hidden layer, concat matmul algebraically split & folded ---
    #   h = x@Wx + (relu(.)@tw2 + tb2)@Wt + onehot@emb@We + b1
    #     = x@Wx + relu(.)@(tw2@Wt) + onehot@(emb@We) + (b1 + tb2@Wt)
    h = jnp.dot(t_h.astype(mdt), wtw_ref[...], preferred_element_type=f32)
    h = h + vec256_ref[ROW_B1:ROW_B1 + 1, :]

    x = x_ref[...]                                  # (TM, N_DIM)
    for d in range(N_DIM):                          # K=3 matmul -> 3 VPU FMAs
        h = h + x[:, d:d + 1] * vec256_ref[ROW_WX0 + d:ROW_WX0 + d + 1, :]

    yoh = yoh_ref[...]                              # (TM, N_CLASSES)
    for c in range(N_CLASSES):                      # K=2 matmul -> 2 VPU FMAs
        h = h + yoh[:, c:c + 1] * vec256_ref[ROW_EWE0 + c:ROW_EWE0 + c + 1, :]

    h = jnp.maximum(
        _layernorm(h, vec256_ref[ROW_G1:ROW_G1 + 1, :],
                   vec256_ref[ROW_BE1:ROW_BE1 + 1, :]), 0.0)

    h = (jnp.dot(h.astype(mdt), w2_ref[...], preferred_element_type=f32)
         + vec256_ref[ROW_B2:ROW_B2 + 1, :])
    h = jnp.maximum(
        _layernorm(h, vec256_ref[ROW_G2:ROW_G2 + 1, :],
                   vec256_ref[ROW_BE2:ROW_BE2 + 1, :]), 0.0)

    h = (jnp.dot(h.astype(mdt), w3_ref[...], preferred_element_type=f32)
         + vec256_ref[ROW_B3:ROW_B3 + 1, :])
    h = jnp.maximum(
        _layernorm(h, vec256_ref[ROW_G3:ROW_G3 + 1, :],
                   vec256_ref[ROW_BE3:ROW_BE3 + 1, :]), 0.0)

    out = jnp.dot(h.astype(mdt), wo_ref[...], preferred_element_type=f32)
    out_ref[...] = out + bo_ref[...]


def make_params(key):
    """Deterministic PyTorch-style (uniform +-1/sqrt(fan_in)) init."""
    def lin(key, fan_in, fan_out):
        k1, k2 = jax.random.split(key)
        bound = 1.0 / np.sqrt(fan_in)
        w = jax.random.uniform(k1, (fan_in, fan_out), jnp.float32, -bound, bound)
        b = jax.random.uniform(k2, (1, fan_out), jnp.float32, -bound, bound)
        return w, b

    keys = jax.random.split(key, 8)
    p = {}
    p["tw1"], p["tb1"] = lin(keys[0], 1, TIME_EMBED_DIM)
    p["tw2"], p["tb2"] = lin(keys[1], TIME_EMBED_DIM, TIME_EMBED_DIM)
    p["emb"] = jax.random.normal(keys[2], (N_CLASSES, LABEL_EMBED_DIM), jnp.float32)

    in_dim = N_DIM + TIME_EMBED_DIM + LABEL_EMBED_DIM
    w1_full, p["b1"] = lin(keys[3], in_dim, HIDDEN_DIM)
    p["wx"] = w1_full[:N_DIM]
    p["wt"] = w1_full[N_DIM:N_DIM + TIME_EMBED_DIM]
    p["we"] = w1_full[N_DIM + TIME_EMBED_DIM:]
    p["g1"] = jnp.ones((1, HIDDEN_DIM), jnp.float32)
    p["be1"] = jnp.zeros((1, HIDDEN_DIM), jnp.float32)

    p["w2"], p["b2"] = lin(keys[4], HIDDEN_DIM, HIDDEN_DIM)
    p["g2"] = jnp.ones((1, HIDDEN_DIM), jnp.float32)
    p["be2"] = jnp.zeros((1, HIDDEN_DIM), jnp.float32)

    p["w3"], p["b3"] = lin(keys[5], HIDDEN_DIM, HIDDEN_DIM)
    p["g3"] = jnp.ones((1, HIDDEN_DIM), jnp.float32)
    p["be3"] = jnp.zeros((1, HIDDEN_DIM), jnp.float32)

    p["wo"], p["bo"] = lin(keys[6], HIDDEN_DIM, N_DIM)
    return p


def pack_params(params, matmul_dtype="float32"):
    """Fold constant matmuls and pack small vectors into kernel-ready arrays."""
    mdt = jnp.dtype(matmul_dtype)

    wtw = (params["tw2"] @ params["wt"])                       # (128, 256)
    b1f = params["b1"] + params["tb2"] @ params["wt"]          # (1, 256)
    ewe = params["emb"] @ params["we"]                         # (n_classes, 256)

    vec128 = jnp.concatenate(
        [params["tw1"].reshape(1, TIME_EMBED_DIM),
         params["tb1"].reshape(1, TIME_EMBED_DIM)], axis=0).astype(jnp.float32)

    vec256 = jnp.concatenate(
        [b1f, params["g1"], params["be1"],
         params["b2"], params["g2"], params["be2"],
         params["b3"], params["g3"], params["be3"],
         params["wx"],            # (N_DIM, 256)
         ewe],                    # (N_CLASSES, 256)
        axis=0).astype(jnp.float32)
    assert vec256.shape[0] == VEC256_ROWS

    return {
        "vec128": vec128,
        "vec256": vec256,
        "wtw": wtw.astype(mdt),
        "w2": params["w2"].astype(mdt),
        "w3": params["w3"].astype(mdt),
        "wo": params["wo"].astype(mdt),
        "bo": params["bo"].astype(jnp.float32),
    }


@functools.partial(jax.jit, static_argnames=("block_rows",))
def _forward_impl(x, t_norm, y_onehot, packed, block_rows):
    B = x.shape[0]
    tm = min(block_rows, _round_up(B, 8))     # batch tile (multiple of 8)
    B_pad = _round_up(B, tm)
    if B_pad != B:
        pad = B_pad - B
        x = jnp.pad(x, ((0, pad), (0, 0)))
        t_norm = jnp.pad(t_norm, ((0, pad), (0, 0)))
        y_onehot = jnp.pad(y_onehot, ((0, pad), (0, 0)))

    def act_spec(width):
        return pl.BlockSpec((tm, width), lambda i: (i, 0))

    def resident_spec(arr):
        # Same block index for every grid step -> weight stays in VMEM.
        return pl.BlockSpec(arr.shape, lambda i: (0, 0))

    out = pl.pallas_call(
        ddpm_kernel,
        out_shape=jax.ShapeDtypeStruct((B_pad, N_DIM), jnp.float32),
        grid=(B_pad // tm,),
        in_specs=[
            act_spec(N_DIM), act_spec(1), act_spec(N_CLASSES),
            resident_spec(packed["vec128"]),
            resident_spec(packed["vec256"]),
            resident_spec(packed["wtw"]),
            resident_spec(packed["w2"]),
            resident_spec(packed["w3"]),
            resident_spec(packed["wo"]),
            resident_spec(packed["bo"]),
        ],
        out_specs=pl.BlockSpec((tm, N_DIM), lambda i: (i, 0)),
        compiler_params=pltpu.CompilerParams(
            dimension_semantics=("parallel",),        # megacore on v7x
            vmem_limit_bytes=32 * 1024 * 1024,        # explicit (v7x insurance)
        ),
    )(x, t_norm, y_onehot, packed["vec128"], packed["vec256"],
      packed["wtw"], packed["w2"], packed["w3"], packed["wo"], packed["bo"])
    return out[:B]


def conditional_ddpm_forward(x, t, y, packed, *, block_rows=256):
    """x: (B, n_dim) f32, t: (B,) int32, y: (B,) int32 or None."""
    B = x.shape[0]
    t_norm = (t.astype(jnp.float32) / N_STEPS).reshape(B, 1)
    if y is None:
        # PyTorch y=None path: zero label embedding == all-zero one-hot.
        y_onehot = jnp.zeros((B, N_CLASSES), jnp.float32)
    else:
        y_onehot = jax.nn.one_hot(y, N_CLASSES, dtype=jnp.float32)
    return _forward_impl(x, t_norm, y_onehot, packed, block_rows)


def reference_forward(x, t, y, params):
    """Plain-JAX reference matching the PyTorch module."""
    B = x.shape[0]
    t_norm = (t.astype(jnp.float32) / N_STEPS).reshape(B, 1)
    t_h = jnp.maximum(t_norm @ params["tw1"] + params["tb1"], 0.0)
    t_emb = t_h @ params["tw2"] + params["tb2"]
    if y is None:
        y_emb = jnp.zeros((B, LABEL_EMBED_DIM), jnp.float32)
    else:
        y_emb = params["emb"][y]

    def ln(h, g, b):
        mu = h.mean(-1, keepdims=True)
        var = ((h - mu) ** 2).mean(-1, keepdims=True)
        return (h - mu) / jnp.sqrt(var + LN_EPS) * g + b

    xin = jnp.concatenate([x, t_emb, y_emb], axis=1)
    w1_full = jnp.concatenate([params["wx"], params["wt"], params["we"]], axis=0)
    h = xin @ w1_full + params["b1"]
    h = jnp.maximum(ln(h, params["g1"], params["be1"]), 0.0)
    h = h @ params["w2"] + params["b2"]
    h = jnp.maximum(ln(h, params["g2"], params["be2"]), 0.0)
    h = h @ params["w3"] + params["b3"]
    h = jnp.maximum(ln(h, params["g3"], params["be3"]), 0.0)
    return h @ params["wo"] + params["bo"]


if __name__ == "__main__":
    key = jax.random.PRNGKey(0)
    k_param, k_x, k_t, k_y = jax.random.split(key, 4)

    params = make_params(k_param)
    packed_f32 = pack_params(params, "float32")

    # --- small-batch check (single grid step) ---
    B = 8
    x = jax.random.normal(k_x, (B, N_DIM), jnp.float32)
    t = jax.random.randint(k_t, (B,), 0, N_STEPS, jnp.int32)
    y = jax.random.randint(k_y, (B,), 0, N_CLASSES, jnp.int32)

    out = conditional_ddpm_forward(x, t, y, packed_f32)
    jax.block_until_ready(out)
    ref = reference_forward(x, t, y, params)
    np.testing.assert_allclose(np.asarray(out), np.asarray(ref),
                               rtol=2e-4, atol=2e-4)

    # --- larger batch: exercises the batch grid (pipelined, padded) ---
    B2 = 200
    x2 = jax.random.normal(k_x, (B2, N_DIM), jnp.float32)
    t2 = jax.random.randint(k_t, (B2,), 0, N_STEPS, jnp.int32)
    y2 = jax.random.randint(k_y, (B2,), 0, N_CLASSES, jnp.int32)
    out2 = conditional_ddpm_forward(x2, t2, y2, packed_f32, block_rows=64)
    jax.block_until_ready(out2)
    ref2 = reference_forward(x2, t2, y2, params)
    np.testing.assert_allclose(np.asarray(out2), np.asarray(ref2),
                               rtol=2e-4, atol=2e-4)

    # --- bf16 matmul operands (v6e/v7x MXU fast path), f32 accumulation/LN ---
    packed_bf16 = pack_params(params, "bfloat16")
    out_bf16 = conditional_ddpm_forward(x2, t2, y2, packed_bf16, block_rows=64)
    jax.block_until_ready(out_bf16)
    np.testing.assert_allclose(np.asarray(out_bf16), np.asarray(ref2),
                               rtol=1e-1, atol=1e-1)

    print("KERNEL_OK")
</pallas_src>

<mosaic_0001>
module attributes {stable_mosaic.version = 11 : i64} {
  func.func @ddpm_kernel(%arg0: i32, %arg1: memref<8x3xf32, #tpu.memory_space<vmem>>, %arg2: memref<8x1xf32, #tpu.memory_space<vmem>>, %arg3: memref<8x2xf32, #tpu.memory_space<vmem>>, %arg4: memref<2x128xf32, #tpu.memory_space<vmem>>, %arg5: memref<14x256xf32, #tpu.memory_space<vmem>>, %arg6: memref<128x256xf32, #tpu.memory_space<vmem>>, %arg7: memref<256x256xf32, #tpu.memory_space<vmem>>, %arg8: memref<256x256xf32, #tpu.memory_space<vmem>>, %arg9: memref<256x3xf32, #tpu.memory_space<vmem>>, %arg10: memref<1x3xf32, #tpu.memory_space<vmem>>, %arg11: memref<8x3xf32, #tpu.memory_space<vmem>>) attributes {dimension_semantics = [#tpu.dimension_semantics<parallel>], iteration_bounds = array<i64: 1>, scalar_prefetch = 0 : i64, scratch_operands = 0 : i64, tpu.core_type = #tpu.core_type<tc>, window_params = [{transform_indices = @transform_0, window_bounds = array<i64: 8, 3>}, {transform_indices = @transform_1, window_bounds = array<i64: 8, 1>}, {transform_indices = @transform_2, window_bounds = array<i64: 8, 2>}, {pipeline_mode = #tpu.pipeline_mode<synchronous>, transform_indices = @transform_3, window_bounds = array<i64: 2, 128>}, {pipeline_mode = #tpu.pipeline_mode<synchronous>, transform_indices = @transform_4, window_bounds = array<i64: 14, 256>}, {pipeline_mode = #tpu.pipeline_mode<synchronous>, transform_indices = @transform_5, window_bounds = array<i64: 128, 256>}, {pipeline_mode = #tpu.pipeline_mode<synchronous>, transform_indices = @transform_6, window_bounds = array<i64: 256, 256>}, {pipeline_mode = #tpu.pipeline_mode<synchronous>, transform_indices = @transform_7, window_bounds = array<i64: 256, 256>}, {pipeline_mode = #tpu.pipeline_mode<synchronous>, transform_indices = @transform_8, window_bounds = array<i64: 256, 3>}, {pipeline_mode = #tpu.pipeline_mode<synchronous>, transform_indices = @transform_9, window_bounds = array<i64: 1, 3>}, {transform_indices = @transform_10, window_bounds = array<i64: 8, 3>}]} {
    %c0 = arith.constant 0 : index
    %c0_0 = arith.constant 0 : index
    %0 = vector.load %arg2[%c0, %c0_0] : memref<8x1xf32, #tpu.memory_space<vmem>>, vector<8x1xf32>
    %c0_1 = arith.constant 0 : index
    %c0_2 = arith.constant 0 : index
    %1 = vector.load %arg4[%c0_1, %c0_2] : memref<2x128xf32, #tpu.memory_space<vmem>>, vector<1x128xf32>
    %c1 = arith.constant 1 : index
    %c0_3 = arith.constant 0 : index
    %2 = vector.load %arg4[%c1, %c0_3] : memref<2x128xf32, #tpu.memory_space<vmem>>, vector<1x128xf32>
    %3 = vector.broadcast %0 : vector<8x1xf32> to vector<8x128xf32>
    %4 = vector.broadcast %1 : vector<1x128xf32> to vector<8x128xf32>
    %5 = arith.mulf %3, %4 : vector<8x128xf32>
    %6 = vector.broadcast %2 : vector<1x128xf32> to vector<8x128xf32>
    %7 = arith.addf %5, %6 : vector<8x128xf32>
    %cst = arith.constant 0.000000e+00 : f32
    %8 = vector.broadcast %cst : f32 to vector<8x128xf32>
    %9 = arith.maximumf %7, %8 : vector<8x128xf32>
    %c0_4 = arith.constant 0 : index
    %c0_5 = arith.constant 0 : index
    %10 = vector.load %arg6[%c0_4, %c0_5] : memref<128x256xf32, #tpu.memory_space<vmem>>, vector<128x256xf32>
    %cst_6 = arith.constant dense<0.000000e+00> : vector<8x256xf32>
    %11 = tpu.matmul %9, %10, %cst_6 {dimension_numbers = #tpu.dot_dimension_numbers<[1], [0], [0], [1], [0, 0, 1, 1], [], []>} : vector<8x128xf32>, vector<128x256xf32>, vector<8x256xf32> -> vector<8x256xf32>
    %c0_7 = arith.constant 0 : index
    %c0_8 = arith.constant 0 : index
    %12 = vector.load %arg5[%c0_7, %c0_8] : memref<14x256xf32, #tpu.memory_space<vmem>>, vector<1x256xf32>
    %13 = vector.broadcast %12 : vector<1x256xf32> to vector<8x256xf32>
    %14 = arith.addf %11, %13 : vector<8x256xf32>
    %c0_9 = arith.constant 0 : index
    %c0_10 = arith.constant 0 : index
    %15 = vector.load %arg1[%c0_9, %c0_10] : memref<8x3xf32, #tpu.memory_space<vmem>>, vector<8x3xf32>
    %16 = vector.extract_strided_slice %15 {offsets = [0, 0], sizes = [8, 1], strides = [1, 1]} : vector<8x3xf32> to vector<8x1xf32>
    %c9 = arith.constant 9 : index
    %c0_11 = arith.constant 0 : index
    %17 = vector.load %arg5[%c9, %c0_11] : memref<14x256xf32, #tpu.memory_space<vmem>>, vector<1x256xf32>
    %18 = vector.broadcast %16 : vector<8x1xf32> to vector<8x256xf32>
    %19 = vector.broadcast %17 : vector<1x256xf32> to vector<8x256xf32>
    %20 = arith.mulf %18, %19 : vector<8x256xf32>
    %21 = arith.addf %14, %20 : vector<8x256xf32>
    %22 = vector.extract_strided_slice %15 {offsets = [0, 1], sizes = [8, 1], strides = [1, 1]} : vector<8x3xf32> to vector<8x1xf32>
    %c10 = arith.constant 10 : index
    %c0_12 = arith.constant 0 : index
    %23 = vector.load %arg5[%c10, %c0_12] : memref<14x256xf32, #tpu.memory_space<vmem>>, vector<1x256xf32>
    %24 = vector.broadcast %22 : vector<8x1xf32> to vector<8x256xf32>
    %25 = vector.broadcast %23 : vector<1x256xf32> to vector<8x256xf32>
    %26 = arith.mulf %24, %25 : vector<8x256xf32>
    %27 = arith.addf %21, %26 : vector<8x256xf32>
    %28 = vector.extract_strided_slice %15 {offsets = [0, 2], sizes = [8, 1], strides = [1, 1]} : vector<8x3xf32> to vector<8x1xf32>
    %c11 = arith.constant 11 : index
    %c0_13 = arith.constant 0 : index
    %29 = vector.load %arg5[%c11, %c0_13] : memref<14x256xf32, #tpu.memory_space<vmem>>, vector<1x256xf32>
    %30 = vector.broadcast %28 : vector<8x1xf32> to vector<8x256xf32>
    %31 = vector.broadcast %29 : vector<1x256xf32> to vector<8x256xf32>
    %32 = arith.mulf %30, %31 : vector<8x256xf32>
    %33 = arith.addf %27, %32 : vector<8x256xf32>
    %c0_14 = arith.constant 0 : index
    %c0_15 = arith.constant 0 : index
    %34 = vector.load %arg3[%c0_14, %c0_15] : memref<8x2xf32, #tpu.memory_space<vmem>>, vector<8x2xf32>
    %35 = vector.extract_strided_slice %34 {offsets = [0, 0], sizes = [8, 1], strides = [1, 1]} : vector<8x2xf32> to vector<8x1xf32>
    %c12 = arith.constant 12 : index
    %c0_16 = arith.constant 0 : index
    %36 = vector.load %arg5[%c12, %c0_16] : memref<14x256xf32, #tpu.memory_space<vmem>>, vector<1x256xf32>
    %37 = vector.broadcast %35 : vector<8x1xf32> to vector<8x256xf32>
    %38 = vector.broadcast %36 : vector<1x256xf32> to vector<8x256xf32>
    %39 = arith.mulf %37, %38 : vector<8x256xf32>
    %40 = arith.addf %33, %39 : vector<8x256xf32>
    %41 = vector.extract_strided_slice %34 {offsets = [0, 1], sizes = [8, 1], strides = [1, 1]} : vector<8x2xf32> to vector<8x1xf32>
    %c13 = arith.constant 13 : index
    %c0_17 = arith.constant 0 : index
    %42 = vector.load %arg5[%c13, %c0_17] : memref<14x256xf32, #tpu.memory_space<vmem>>, vector<1x256xf32>
    %43 = vector.broadcast %41 : vector<8x1xf32> to vector<8x256xf32>
    %44 = vector.broadcast %42 : vector<1x256xf32> to vector<8x256xf32>
    %45 = arith.mulf %43, %44 : vector<8x256xf32>
    %46 = arith.addf %40, %45 : vector<8x256xf32>
    %c1_18 = arith.constant 1 : index
    %c0_19 = arith.constant 0 : index
    %47 = vector.load %arg5[%c1_18, %c0_19] : memref<14x256xf32, #tpu.memory_space<vmem>>, vector<1x256xf32>
    %c2 = arith.constant 2 : index
    %c0_20 = arith.constant 0 : index
    %48 = vector.load %arg5[%c2, %c0_20] : memref<14x256xf32, #tpu.memory_space<vmem>>, vector<1x256xf32>
    %cst_21 = arith.constant dense<0.000000e+00> : vector<8xf32>
    %49 = vector.multi_reduction <add>, %46, %cst_21 [1] : vector<8x256xf32> to vector<8xf32>
    %50 = vector.shape_cast %49 : vector<8xf32> to vector<8x1xf32>
    %cst_22 = arith.constant 2.560000e+02 : f32
    %51 = vector.broadcast %cst_22 : f32 to vector<8x1xf32>
    %52 = arith.divf %50, %51 : vector<8x1xf32>
    %53 = vector.broadcast %52 : vector<8x1xf32> to vector<8x256xf32>
    %54 = arith.subf %46, %53 : vector<8x256xf32>
    %55 = arith.mulf %54, %54 : vector<8x256xf32>
    %cst_23 = arith.constant dense<0.000000e+00> : vector<8xf32>
    %56 = vector.multi_reduction <add>, %55, %cst_23 [1] : vector<8x256xf32> to vector<8xf32>
    %57 = vector.shape_cast %56 : vector<8xf32> to vector<8x1xf32>
    %cst_24 = arith.constant 2.560000e+02 : f32
    %58 = vector.broadcast %cst_24 : f32 to vector<8x1xf32>
    %59 = arith.divf %57, %58 : vector<8x1xf32>
    %60 = vector.broadcast %52 : vector<8x1xf32> to vector<8x256xf32>
    %61 = arith.subf %46, %60 : vector<8x256xf32>
    %cst_25 = arith.constant 9.99999974E-6 : f32
    %62 = vector.broadcast %cst_25 : f32 to vector<8x1xf32>
    %63 = arith.addf %59, %62 : vector<8x1xf32>
    %64 = math.rsqrt %63 : vector<8x1xf32>
    %65 = vector.broadcast %64 : vector<8x1xf32> to vector<8x256xf32>
    %66 = arith.mulf %61, %65 : vector<8x256xf32>
    %67 = vector.broadcast %47 : vector<1x256xf32> to vector<8x256xf32>
    %68 = arith.mulf %66, %67 : vector<8x256xf32>
    %69 = vector.broadcast %48 : vector<1x256xf32> to vector<8x256xf32>
    %70 = arith.addf %68, %69 : vector<8x256xf32>
    %cst_26 = arith.constant 0.000000e+00 : f32
    %71 = vector.broadcast %cst_26 : f32 to vector<8x256xf32>
    %72 = arith.maximumf %70, %71 : vector<8x256xf32>
    %c0_27 = arith.constant 0 : index
    %c0_28 = arith.constant 0 : index
    %73 = vector.load %arg7[%c0_27, %c0_28] : memref<256x256xf32, #tpu.memory_space<vmem>>, vector<256x256xf32>
    %cst_29 = arith.constant dense<0.000000e+00> : vector<8x256xf32>
    %74 = tpu.matmul %72, %73, %cst_29 {dimension_numbers = #tpu.dot_dimension_numbers<[1], [0], [0], [1], [0, 0, 1, 1], [], []>} : vector<8x256xf32>, vector<256x256xf32>, vector<8x256xf32> -> vector<8x256xf32>
    %c3 = arith.constant 3 : index
    %c0_30 = arith.constant 0 : index
    %75 = vector.load %arg5[%c3, %c0_30] : memref<14x256xf32, #tpu.memory_space<vmem>>, vector<1x256xf32>
    %76 = vector.broadcast %75 : vector<1x256xf32> to vector<8x256xf32>
    %77 = arith.addf %74, %76 : vector<8x256xf32>
    %c4 = arith.constant 4 : index
    %c0_31 = arith.constant 0 : index
    %78 = vector.load %arg5[%c4, %c0_31] : memref<14x256xf32, #tpu.memory_space<vmem>>, vector<1x256xf32>
    %c5 = arith.constant 5 : index
    %c0_32 = arith.constant 0 : index
    %79 = vector.load %arg5[%c5, %c0_32] : memref<14x256xf32, #tpu.memory_space<vmem>>, vector<1x256xf32>
    %cst_33 = arith.constant dense<0.000000e+00> : vector<8xf32>
    %80 = vector.multi_reduction <add>, %77, %cst_33 [1] : vector<8x256xf32> to vector<8xf32>
    %81 = vector.shape_cast %80 : vector<8xf32> to vector<8x1xf32>
    %cst_34 = arith.constant 2.560000e+02 : f32
    %82 = vector.broadcast %cst_34 : f32 to vector<8x1xf32>
    %83 = arith.divf %81, %82 : vector<8x1xf32>
    %84 = vector.broadcast %83 : vector<8x1xf32> to vector<8x256xf32>
    %85 = arith.subf %77, %84 : vector<8x256xf32>
    %86 = arith.mulf %85, %85 : vector<8x256xf32>
    %cst_35 = arith.constant dense<0.000000e+00> : vector<8xf32>
    %87 = vector.multi_reduction <add>, %86, %cst_35 [1] : vector<8x256xf32> to vector<8xf32>
    %88 = vector.shape_cast %87 : vector<8xf32> to vector<8x1xf32>
    %cst_36 = arith.constant 2.560000e+02 : f32
    %89 = vector.broadcast %cst_36 : f32 to vector<8x1xf32>
    %90 = arith.divf %88, %89 : vector<8x1xf32>
    %91 = vector.broadcast %83 : vector<8x1xf32> to vector<8x256xf32>
    %92 = arith.subf %77, %91 : vector<8x256xf32>
    %cst_37 = arith.constant 9.99999974E-6 : f32
    %93 = vector.broadcast %cst_37 : f32 to vector<8x1xf32>
    %94 = arith.addf %90, %93 : vector<8x1xf32>
    %95 = math.rsqrt %94 : vector<8x1xf32>
    %96 = vector.broadcast %95 : vector<8x1xf32> to vector<8x256xf32>
    %97 = arith.mulf %92, %96 : vector<8x256xf32>
    %98 = vector.broadcast %78 : vector<1x256xf32> to vector<8x256xf32>
    %99 = arith.mulf %97, %98 : vector<8x256xf32>
    %100 = vector.broadcast %79 : vector<1x256xf32> to vector<8x256xf32>
    %101 = arith.addf %99, %100 : vector<8x256xf32>
    %cst_38 = arith.constant 0.000000e+00 : f32
    %102 = vector.broadcast %cst_38 : f32 to vector<8x256xf32>
    %103 = arith.maximumf %101, %102 : vector<8x256xf32>
    %c0_39 = arith.constant 0 : index
    %c0_40 = arith.constant 0 : index
    %104 = vector.load %arg8[%c0_39, %c0_40] : memref<256x256xf32, #tpu.memory_space<vmem>>, vector<256x256xf32>
    %cst_41 = arith.constant dense<0.000000e+00> : vector<8x256xf32>
    %105 = tpu.matmul %103, %104, %cst_41 {dimension_numbers = #tpu.dot_dimension_numbers<[1], [0], [0], [1], [0, 0, 1, 1], [], []>} : vector<8x256xf32>, vector<256x256xf32>, vector<8x256xf32> -> vector<8x256xf32>
    %c6 = arith.constant 6 : index
    %c0_42 = arith.constant 0 : index
    %106 = vector.load %arg5[%c6, %c0_42] : memref<14x256xf32, #tpu.memory_space<vmem>>, vector<1x256xf32>
    %107 = vector.broadcast %106 : vector<1x256xf32> to vector<8x256xf32>
    %108 = arith.addf %105, %107 : vector<8x256xf32>
    %c7 = arith.constant 7 : index
    %c0_43 = arith.constant 0 : index
    %109 = vector.load %arg5[%c7, %c0_43] : memref<14x256xf32, #tpu.memory_space<vmem>>, vector<1x256xf32>
    %c8 = arith.constant 8 : index
    %c0_44 = arith.constant 0 : index
    %110 = vector.load %arg5[%c8, %c0_44] : memref<14x256xf32, #tpu.memory_space<vmem>>, vector<1x256xf32>
    %cst_45 = arith.constant dense<0.000000e+00> : vector<8xf32>
    %111 = vector.multi_reduction <add>, %108, %cst_45 [1] : vector<8x256xf32> to vector<8xf32>
    %112 = vector.shape_cast %111 : vector<8xf32> to vector<8x1xf32>
    %cst_46 = arith.constant 2.560000e+02 : f32
    %113 = vector.broadcast %cst_46 : f32 to vector<8x1xf32>
    %114 = arith.divf %112, %113 : vector<8x1xf32>
    %115 = vector.broadcast %114 : vector<8x1xf32> to vector<8x256xf32>
    %116 = arith.subf %108, %115 : vector<8x256xf32>
    %117 = arith.mulf %116, %116 : vector<8x256xf32>
    %cst_47 = arith.constant dense<0.000000e+00> : vector<8xf32>
    %118 = vector.multi_reduction <add>, %117, %cst_47 [1] : vector<8x256xf32> to vector<8xf32>
    %119 = vector.shape_cast %118 : vector<8xf32> to vector<8x1xf32>
    %cst_48 = arith.constant 2.560000e+02 : f32
    %120 = vector.broadcast %cst_48 : f32 to vector<8x1xf32>
    %121 = arith.divf %119, %120 : vector<8x1xf32>
    %122 = vector.broadcast %114 : vector<8x1xf32> to vector<8x256xf32>
    %123 = arith.subf %108, %122 : vector<8x256xf32>
    %cst_49 = arith.constant 9.99999974E-6 : f32
    %124 = vector.broadcast %cst_49 : f32 to vector<8x1xf32>
    %125 = arith.addf %121, %124 : vector<8x1xf32>
    %126 = math.rsqrt %125 : vector<8x1xf32>
    %127 = vector.broadcast %126 : vector<8x1xf32> to vector<8x256xf32>
    %128 = arith.mulf %123, %127 : vector<8x256xf32>
    %129 = vector.broadcast %109 : vector<1x256xf32> to vector<8x256xf32>
    %130 = arith.mulf %128, %129 : vector<8x256xf32>
    %131 = vector.broadcast %110 : vector<1x256xf32> to vector<8x256xf32>
    %132 = arith.addf %130, %131 : vector<8x256xf32>
    %cst_50 = arith.constant 0.000000e+00 : f32
    %133 = vector.broadcast %cst_50 : f32 to vector<8x256xf32>
    %134 = arith.maximumf %132, %133 : vector<8x256xf32>
    %c0_51 = arith.constant 0 : index
    %c0_52 = arith.constant 0 : index
    %135 = vector.load %arg9[%c0_51, %c0_52] : memref<256x3xf32, #tpu.memory_space<vmem>>, vector<256x3xf32>
    %cst_53 = arith.constant dense<0.000000e+00> : vector<8x3xf32>
    %136 = tpu.matmul %134, %135, %cst_53 {dimension_numbers = #tpu.dot_dimension_numbers<[1], [0], [0], [1], [0, 0, 1, 1], [], []>} : vector<8x256xf32>, vector<256x3xf32>, vector<8x3xf32> -> vector<8x3xf32>
    %c0_54 = arith.constant 0 : index
    %c0_55 = arith.constant 0 : index
    %137 = vector.load %arg10[%c0_54, %c0_55] : memref<1x3xf32, #tpu.memory_space<vmem>>, vector<1x3xf32>
    %138 = vector.broadcast %137 : vector<1x3xf32> to vector<8x3xf32>
    %139 = arith.addf %136, %138 : vector<8x3xf32>
    %c0_56 = arith.constant 0 : index
    %c0_57 = arith.constant 0 : index
    %140 = vector.load %arg11[%c0_56, %c0_57] : memref<8x3xf32, #tpu.memory_space<vmem>>, vector<8x3xf32>
    tpu.vector_store %arg11[%c0_56, %c0_57], %139 {strides = array<i32>} : memref<8x3xf32, #tpu.memory_space<vmem>>, vector<8x3xf32>,
    return
  }
  func.func @transform_0(%arg0: i32) -> (i32, i32) {
    %c0_i32 = arith.constant 0 : i32
    %c0_i32_0 = arith.constant 0 : i32
    return %arg0, %c0_i32 : i32, i32
  }
  func.func @transform_1(%arg0: i32) -> (i32, i32) {
    %c0_i32 = arith.constant 0 : i32
    %c0_i32_0 = arith.constant 0 : i32
    return %arg0, %c0_i32 : i32, i32
  }
  func.func @transform_2(%arg0: i32) -> (i32, i32) {
    %c0_i32 = arith.constant 0 : i32
    %c0_i32_0 = arith.constant 0 : i32
    return %arg0, %c0_i32 : i32, i32
  }
  func.func @transform_3(%arg0: i32) -> (i32, i32) {
    %c0_i32 = arith.constant 0 : i32
    %c0_i32_0 = arith.constant 0 : i32
    %c0_i32_1 = arith.constant 0 : i32
    return %c0_i32, %c0_i32_0 : i32, i32
  }
  func.func @transform_4(%arg0: i32) -> (i32, i32) {
    %c0_i32 = arith.constant 0 : i32
    %c0_i32_0 = arith.constant 0 : i32
    %c0_i32_1 = arith.constant 0 : i32
    return %c0_i32, %c0_i32_0 : i32, i32
  }
  func.func @transform_5(%arg0: i32) -> (i32, i32) {
    %c0_i32 = arith.constant 0 : i32
    %c0_i32_0 = arith.constant 0 : i32
    %c0_i32_1 = arith.constant 0 : i32
    return %c0_i32, %c0_i32_0 : i32, i32
  }
  func.func @transform_6(%arg0: i32) -> (i32, i32) {
    %c0_i32 = arith.constant 0 : i32
    %c0_i32_0 = arith.constant 0 : i32
    %c0_i32_1 = arith.constant 0 : i32
    return %c0_i32, %c0_i32_0 : i32, i32
  }
  func.func @transform_7(%arg0: i32) -> (i32, i32) {
    %c0_i32 = arith.constant 0 : i32
    %c0_i32_0 = arith.constant 0 : i32
    %c0_i32_1 = arith.constant 0 : i32
    return %c0_i32, %c0_i32_0 : i32, i32
  }
  func.func @transform_8(%arg0: i32) -> (i32, i32) {
    %c0_i32 = arith.constant 0 : i32
    %c0_i32_0 = arith.constant 0 : i32
    %c0_i32_1 = arith.constant 0 : i32
    return %c0_i32, %c0_i32_0 : i32, i32
  }
  func.func @transform_9(%arg0: i32) -> (i32, i32) {
    %c0_i32 = arith.constant 0 : i32
    %c0_i32_0 = arith.constant 0 : i32
    %c0_i32_1 = arith.constant 0 : i32
    return %c0_i32, %c0_i32_0 : i32, i32
  }
  func.func @transform_10(%arg0: i32) -> (i32, i32) {
    %c0_i32 = arith.constant 0 : i32
    %c0_i32_0 = arith.constant 0 : i32
    return %arg0, %c0_i32 : i32, i32
  }
}

</mosaic_0001>

<llo_original>
// kernel: _forward_impl.1
$region0: #{_forward_impl.1}
  #allocation0 [shape = 'u32[]', space=smem, size = 0x4, offset = 0x4, fixed_abs, tag = 'smem constant byte address 0x4 - core index']
  #allocation1 [shape = 'u32[144,128]{1,0:T(1,128)}', space=vmem, size = 0x12000, scoped, tag = 'internal scratch']
  %s0 = inlined_call_operand.vmem [shape: f32[8,3], index: 0, kind: input, shape index: {}]
  %s1 = inlined_call_operand.vmem [shape: f32[8,1], index: 1, kind: input, shape index: {}]
  %s2 = inlined_call_operand.vmem [shape: f32[8,2], index: 2, kind: input, shape index: {}]
  %s3 = inlined_call_operand.vmem [shape: f32[2,128], index: 3, kind: input, shape index: {}]
  %s4 = inlined_call_operand.vmem [shape: f32[14,256], index: 4, kind: input, shape index: {}]
  %s5 = inlined_call_operand.vmem [shape: f32[128,256], index: 5, kind: input, shape index: {}]
  %s6 = inlined_call_operand.hbm [shape: f32[256,256], index: 6, kind: input, shape index: {}]
  %s7 = inlined_call_operand.hbm [shape: f32[256,256], index: 7, kind: input, shape index: {}]
  %s8 = inlined_call_operand.vmem [shape: f32[256,3], index: 8, kind: input, shape index: {}]
  %s9 = inlined_call_operand.vmem [shape: f32[1,3], index: 9, kind: input, shape index: {}]
  %s10 = inlined_call_operand.vmem [shape: f32[8,3], index: 10, kind: output, shape index: {}]
  %s11 = sld [smem:[#allocation0]]
  $region58: #{_forward_impl.1} parent=0
    _
  %s13 = ssub.s32 1, %s11
  %s14 = scalar_select 0, %s13, %s11
  $region1: #{_forward_impl.1} parent=0
    #allocation2 [shape = 'u8[262144]{0}', space=vmem, size = 0x40000, scoped, tag = 'input window, operand 6, single buffered']
    #allocation3 [shape = 's32[1]{0}', space=sflag, size = 0x4, scoped, tag = 'scoped memory for _forward_impl.1']
    #allocation4 [shape = 'u8[262144]{0}', space=vmem, size = 0x40000, scoped, tag = 'input window, operand 7, single buffered']
    #allocation5 [shape = 's32[1]{0}', space=sflag, size = 0x4, scoped, tag = 'scoped memory for _forward_impl.1']
    %15 = vsyncpa [#allocation3], 0
    %16 = vsyncpa [#allocation5], 0
    // Predicated region
    $region2: #{_forward_impl.1} parent=1 // pred_check
      _
    $region3: #{_forward_impl.1} parent=1 // pred_check_branch
      %18 = sbr.rel (0) target = $region5
    $region4: #{_forward_impl.1} parent=1 // pred_region
      _
    $region5: #{_forward_impl.1} parent=1 // pred_fallthru
      _
    // Predicated region
    $region6: #{_forward_impl.1} parent=1 // pred_check
      _
    $region7: #{_forward_impl.1} parent=1 // pred_check_branch
      %20 = sbr.rel (0) target = $region9
    $region8: #{_forward_impl.1} parent=1 // pred_region
      _
    $region9: #{_forward_impl.1} parent=1 // pred_fallthru
      _
    // Predicated region
    $region10: #{_forward_impl.1} parent=1 // pred_check
      _
    $region11: #{_forward_impl.1} parent=1 // pred_check_branch
      %22 = sbr.rel (0) target = $region13
    $region12: #{_forward_impl.1} parent=1 // pred_region
      _
    $region13: #{_forward_impl.1} parent=1 // pred_fallthru
      _
    // Predicated region
    $region14: #{_forward_impl.1} parent=1 // pred_check
      _
    $region15: #{_forward_impl.1} parent=1 // pred_check_branch
      %24 = sbr.rel (0) target = $region17
    $region16: #{_forward_impl.1} parent=1 // pred_region
      _
    $region17: #{_forward_impl.1} parent=1 // pred_fallthru
      _
    // Predicated region
    $region18: #{_forward_impl.1} parent=1 // pred_check
      _
    $region19: #{_forward_impl.1} parent=1 // pred_check_branch
      %26 = sbr.rel (0) target = $region21
    $region20: #{_forward_impl.1} parent=1 // pred_region
      _
    $region21: #{_forward_impl.1} parent=1 // pred_fallthru
      _
    // Predicated region
    $region22: #{_forward_impl.1} parent=1 // pred_check
      _
    $region23: #{_forward_impl.1} parent=1 // pred_check_branch
      %28 = sbr.rel (0) target = $region25
    $region24: #{_forward_impl.1} parent=1 // pred_region
      _
    $region25: #{_forward_impl.1} parent=1 // pred_fallthru
      _
    // Predicated region
    $region26: #{_forward_impl.1} parent=1 // pred_check
      _
    $region27: #{_forward_impl.1} parent=1 // pred_check_branch
      %30 = sbr.rel (0) target = $region29
    $region28: #{_forward_impl.1} parent=1 // pred_region
      %s32 = ssub.s32 8192, 8192
      %33 = vsyncadd [#allocation3], %s32
      %s34 = sshll.u32 [#allocation2], 4
      %s35 = int_to_ptr.vmem [resolvable:$true] %s34
      %40 = dma.hbm_to_vmem [thread:$0]  %s6, 8192, %s35, [#allocation3], 256, 256, 16
    $region29: #{_forward_impl.1} parent=1 // pred_fallthru
      _
    // Predicated region
    $region30: #{_forward_impl.1} parent=1 // pred_check
      _
    $region31: #{_forward_impl.1} parent=1 // pred_check_branch
      %42 = sbr.rel (0) target = $region33
    $region32: #{_forward_impl.1} parent=1 // pred_region
      %s44 = ssub.s32 8192, 8192
      %45 = vsyncadd [#allocation5], %s44
      %s46 = sshll.u32 [#allocation4], 4
      %s47 = int_to_ptr.vmem [resolvable:$true] %s46
      %52 = dma.hbm_to_vmem [thread:$0]  %s7, 8192, %s47, [#allocation5], 256, 256, 16
    $region33: #{_forward_impl.1} parent=1 // pred_fallthru
      _
    // Predicated region
    $region34: #{_forward_impl.1} parent=1 // pred_check
      _
    $region35: #{_forward_impl.1} parent=1 // pred_check_branch
      %54 = sbr.rel (0) target = $region37
    $region36: #{_forward_impl.1} parent=1 // pred_region
      _
    $region37: #{_forward_impl.1} parent=1 // pred_fallthru
      _
    // Predicated region
    $region38: #{_forward_impl.1} parent=1 // pred_check
      _
    $region39: #{_forward_impl.1} parent=1 // pred_check_branch
      %56 = sbr.rel (0) target = $region41
    $region40: #{_forward_impl.1} parent=1 // pred_region
      _
    $region41: #{_forward_impl.1} parent=1 // pred_fallthru
      _
    // Predicated region
    $region42: #{_forward_impl.1} parent=1 // pred_check
      _
    $region43: #{_forward_impl.1} parent=1 // pred_check_branch
      %58 = sbr.rel (0) target = $region45
    $region44: #{_forward_impl.1} parent=1 // pred_region
      %59 = dma.done [#allocation3], 8192
    $region45: #{_forward_impl.1} parent=1 // pred_fallthru
      _
    // Predicated region
    $region46: #{_forward_impl.1} parent=1 // pred_check
      _
    $region47: #{_forward_impl.1} parent=1 // pred_check_branch
      %61 = sbr.rel (0) target = $region49
    $region48: #{_forward_impl.1} parent=1 // pred_region
      %62 = dma.done [#allocation5], 8192
    $region49: #{_forward_impl.1} parent=1 // pred_fallthru
      _
    %v63 = vld [vmem:[%s1] sm:$0xff]
    %v64 = vld [vmem:[%s3] sm:$0x1]
    %v65 = vld [vmem:[%s3 + $0x1] sm:$0x1]
    %67 = vset.pattern.permute.xlu0 0
    %68 = vperm.xlu0 %67, %v63
    %v69 = vpop.permute.xlu0 %68
    %v71 = vlaneseq
    %v72 = vshrl.u32 %v71, 7
    %v73 = vsub.s32 0, %v72
    %v74 = vrot.slane %v64, %v73
    %v75 = vmul.f32 %v69, %v74
    %v76 = vlaneseq
    %v77 = vshrl.u32 %v76, 7
    %v78 = vsub.s32 0, %v77
    %v79 = vrot.slane %v65, %v78
    %v80 = vadd.f32 %v75, %v79
    %v81 = vmax.f32 %v80, 0.0
    %v82 = vld [vmem:[%s5] sm:$0xff]
    %v83 = vld [vmem:[%s5 + $0x8] sm:$0xff]
    %v84 = vld [vmem:[%s5 + $0x10] sm:$0xff]
    %v85 = vld [vmem:[%s5 + $0x18] sm:$0xff]
    %v86 = vld [vmem:[%s5 + $0x20] sm:$0xff]
    %v87 = vld [vmem:[%s5 + $0x28] sm:$0xff]
    %v88 = vld [vmem:[%s5 + $0x30] sm:$0xff]
    %v89 = vld [vmem:[%s5 + $0x38] sm:$0xff]
    %v90 = vld [vmem:[%s5 + $0x40] sm:$0xff]
    %v91 = vld [vmem:[%s5 + $0x48] sm:$0xff]
    %v92 = vld [vmem:[%s5 + $0x50] sm:$0xff]
    %v93 = vld [vmem:[%s5 + $0x58] sm:$0xff]
    %v94 = vld [vmem:[%s5 + $0x60] sm:$0xff]
    %v95 = vld [vmem:[%s5 + $0x68] sm:$0xff]
    %v96 = vld [vmem:[%s5 + $0x70] sm:$0xff]
    %v97 = vld [vmem:[%s5 + $0x78] sm:$0xff]
    %v98 = vld [vmem:[%s5 + $0x80] sm:$0xff]
    %v99 = vld [vmem:[%s5 + $0x88] sm:$0xff]
    %v100 = vld [vmem:[%s5 + $0x90] sm:$0xff]
    %v101 = vld [vmem:[%s5 + $0x98] sm:$0xff]
    %v102 = vld [vmem:[%s5 + $0xa0] sm:$0xff]
    %v103 = vld [vmem:[%s5 + $0xa8] sm:$0xff]
    %v104 = vld [vmem:[%s5 + $0xb0] sm:$0xff]
    %v105 = vld [vmem:[%s5 + $0xb8] sm:$0xff]
    %v106 = vld [vmem:[%s5 + $0xc0] sm:$0xff]
    %v107 = vld [vmem:[%s5 + $0xc8] sm:$0xff]
    %v108 = vld [vmem:[%s5 + $0xd0] sm:$0xff]
    %v109 = vld [vmem:[%s5 + $0xd8] sm:$0xff]
    %v110 = vld [vmem:[%s5 + $0xe0] sm:$0xff]
    %v111 = vld [vmem:[%s5 + $0xe8] sm:$0xff]
    %v112 = vld [vmem:[%s5 + $0xf0] sm:$0xff]
    %v113 = vld [vmem:[%s5 + $0xf8] sm:$0xff]
    %v114 = vld [vmem:[%s4] ss:$8 sm:$0x3]
    %v116 = vlaneseq
    %v117 = vshrl.u32 %v116, 7
    %v118 = vsub.s32 0, %v117
    %v119 = vrot.slane %v114, %v118
    %v120 = vlaneseq
    %v121 = vshrl.u32 %v120, 7
    %v122 = vsub.s32 1, %v121
    %v123 = vrot.slane %v114, %v122
    %126 = vmatprep.subr.mxu0 %v83
    %127 = vmatpush1.msra.mxu0 %v82
    %128 = vmatprep.subr.mxu0 %v85
    %129 = vmatpush1.msra.mxu0 %v84
    %130 = vmatprep.subr.mxu0 %v87
    %131 = vmatpush1.msra.mxu0 %v86
    %132 = vmatprep.subr.mxu0 %v89
    %133 = vmatpush1.msra.mxu0 %v88
    %134 = vmatprep.subr.mxu0 %v91
    %135 = vmatpush1.msra.mxu0 %v90
    %136 = vmatprep.subr.mxu0 %v93
    %137 = vmatpush1.msra.mxu0 %v92
    %138 = vmatprep.subr.mxu0 %v95
    %139 = vmatpush1.msra.mxu0 %v94
    %140 = vmatprep.subr.mxu0 %v97
    %141 = vmatpush1.msra.mxu0 %v96
    %142 = vmatprep.subr.mxu0 %v99
    %143 = vmatpush1.msra.mxu0 %v98
    %144 = vmatprep.subr.mxu0 %v101
    %145 = vmatpush1.msra.mxu0 %v100
    %146 = vmatprep.subr.mxu0 %v103
    %147 = vmatpush1.msra.mxu0 %v102
    %148 = vmatprep.subr.mxu0 %v105
    %149 = vmatpush1.msra.mxu0 %v104
    %150 = vmatprep.subr.mxu0 %v107
    %151 = vmatpush1.msra.mxu0 %v106
    %152 = vmatprep.subr.mxu0 %v109
    %153 = vmatpush1.msra.mxu0 %v108
    %154 = vmatprep.subr.mxu0 %v111
    %155 = vmatpush1.msra.mxu0 %v110
    %156 = vmatprep.subr.mxu0 %v113
    %157 = vmatpush1.msra.mxu0 %v112
    %158 = vmatprep.subr.mxu0 0.0
    %159 = vmatpush1.msra.mxu0 0.0
    %160 = vmatprep.subr.mxu0 0.0
    %161 = vmatpush1.msra.mxu0 0.0
    %162 = vmatprep.subr.mxu0 0.0
    %163 = vmatpush1.msra.mxu0 0.0
    %164 = vmatprep.subr.mxu0 0.0
    %165 = vmatpush1.msra.mxu0 0.0
    %166 = vmatprep.subr.mxu0 0.0
    %167 = vmatpush1.msra.mxu0 0.0
    %168 = vmatprep.subr.mxu0 0.0
    %169 = vmatpush1.msra.mxu0 0.0
    %170 = vmatprep.subr.mxu0 0.0
    %171 = vmatpush1.msra.mxu0 0.0
    %172 = vmatprep.subr.mxu0 0.0
    %173 = vmatpush1.msra.mxu0 0.0
    %174 = vmatprep.subr.mxu0 0.0
    %175 = vmatpush1.msra.mxu0 0.0
    %176 = vmatprep.subr.mxu0 0.0
    %177 = vmatpush1.msra.mxu0 0.0
    %178 = vmatprep.subr.mxu0 0.0
    %179 = vmatpush1.msra.mxu0 0.0
    %180 = vmatprep.subr.mxu0 0.0
    %181 = vmatpush1.msra.mxu0 0.0
    %182 = vmatprep.subr.mxu0 0.0
    %183 = vmatpush1.msra.mxu0 0.0
    %184 = vmatprep.subr.mxu0 0.0
    %185 = vmatpush1.msra.mxu0 0.0
    %186 = vmatprep.subr.mxu0 0.0
    %187 = vmatpush1.msra.mxu0 0.0
    %188 = vmatprep.subr.mxu0 0.0
    %189 = vmatpush1.msra.mxu0 0.0
    %190 = vmatprep.mubr.f32.mxu0 0.0
    %191 = vmatmul.mubr.f32.gmra.mrb[0].mxu0 %v81
    %v192 = vpop.f32.mrb[0].mxu0
    %v193 = vadd.f32 %v119, %v192
    %v194 = vpop.f32.mrb[0].mxu0
    %v195 = vadd.f32 %v123, %v194
    %196 = vdwg.mxu0
    %v197 = vld [vmem:[%s0] sm:$0xff]
    %s198 = scalar_lea.vmem %s4, 17
    %v199 = vld [vmem:[%s198] ss:$8 sm:$0x3]
    %201 = vset.pattern.permute.xlu0 0
    %202 = vperm.xlu0 %201, %v197
    %v203 = vpop.permute.xlu0 %202
    %v206 = vlaneseq
    %v207 = vshrl.u32 %v206, 7
    %v208 = vsub.s32 0, %v207
    %v209 = vrot.slane %v199, %v208
    %v210 = vlaneseq
    %v211 = vshrl.u32 %v210, 7
    %v212 = vsub.s32 1, %v211
    %v213 = vrot.slane %v199, %v212
    %v216 = vmul.f32 %v203, %v209
    %v217 = vmul.f32 %v203, %v213
    %v218 = vadd.f32 %v193, %v216
    %v219 = vadd.f32 %v195, %v217
    %s220 = scalar_lea.vmem %s4, 18
    %v221 = vld [vmem:[%s220] ss:$8 sm:$0x3]
    %222 = vset.pattern.permute.xlu0 1
    %223 = vperm.xlu0 %222, %v197
    %v224 = vpop.permute.xlu0 %223
    %v227 = vlaneseq
    %v228 = vshrl.u32 %v227, 7
    %v229 = vsub.s32 0, %v228
    %v230 = vrot.slane %v221, %v229
    %v231 = vlaneseq
    %v232 = vshrl.u32 %v231, 7
    %v233 = vsub.s32 1, %v232
    %v234 = vrot.slane %v221, %v233
    %v237 = vmul.f32 %v224, %v230
    %v238 = vmul.f32 %v224, %v234
    %v239 = vadd.f32 %v218, %v237
    %v240 = vadd.f32 %v219, %v238
    %s241 = scalar_lea.vmem %s4, 19
    %v242 = vld [vmem:[%s241] ss:$8 sm:$0x3]
    %243 = vset.pattern.permute.xlu0 2
    %244 = vperm.xlu0 %243, %v197
    %v245 = vpop.permute.xlu0 %244
    %v248 = vlaneseq
    %v249 = vshrl.u32 %v248, 7
    %v250 = vsub.s32 0, %v249
    %v251 = vrot.slane %v242, %v250
    %v252 = vlaneseq
    %v253 = vshrl.u32 %v252, 7
    %v254 = vsub.s32 1, %v253
    %v255 = vrot.slane %v242, %v254
    %v258 = vmul.f32 %v245, %v251
    %v259 = vmul.f32 %v245, %v255
    %v260 = vadd.f32 %v239, %v258
    %v261 = vadd.f32 %v240, %v259
    %v262 = vld [vmem:[%s2] sm:$0xff]
    %s263 = scalar_lea.vmem %s4, 20
    %v264 = vld [vmem:[%s263] ss:$8 sm:$0x3]
    %266 = vset.pattern.permute.xlu0 0
    %267 = vperm.xlu0 %266, %v262
    %v268 = vpop.permute.xlu0 %267
    %v271 = vlaneseq
    %v272 = vshrl.u32 %v271, 7
    %v273 = vsub.s32 0, %v272
    %v274 = vrot.slane %v264, %v273
    %v275 = vlaneseq
    %v276 = vshrl.u32 %v275, 7
    %v277 = vsub.s32 1, %v276
    %v278 = vrot.slane %v264, %v277
    %v281 = vmul.f32 %v268, %v274
    %v282 = vmul.f32 %v268, %v278
    %v283 = vadd.f32 %v260, %v281
    %v284 = vadd.f32 %v261, %v282
    %s285 = scalar_lea.vmem %s4, 21
    %v286 = vld [vmem:[%s285] ss:$8 sm:$0x3]
    %287 = vset.pattern.permute.xlu0 1
    %288 = vperm.xlu0 %287, %v262
    %v289 = vpop.permute.xlu0 %288
    %v292 = vlaneseq
    %v293 = vshrl.u32 %v292, 7
    %v294 = vsub.s32 0, %v293
    %v295 = vrot.slane %v286, %v294
    %v296 = vlaneseq
    %v297 = vshrl.u32 %v296, 7
    %v298 = vsub.s32 1, %v297
    %v299 = vrot.slane %v286, %v298
    %v302 = vmul.f32 %v289, %v295
    %v303 = vmul.f32 %v289, %v299
    %v304 = vadd.f32 %v283, %v302
    %v305 = vadd.f32 %v284, %v303
    %s306 = scalar_lea.vmem %s4, 1
    %v307 = vld [vmem:[%s306] ss:$8 sm:$0x3]
    %s308 = scalar_lea.vmem %s4, 2
    %v309 = vld [vmem:[%s308] ss:$8 sm:$0x3]
    %v310 = vadd.f32 %v304, %v305
    %311 = vadd.xlane.f32.xlu0 %v310
    %v312 = vpop.xlane.xlu0 %311
    %v313 = vrcp.pop 256.0
    %v314 = vmul.f32 %v312, %v313
    %v315 = vsub.f32 %v304, %v314
    %v316 = vsub.f32 %v305, %v314
    %v317 = vmul.f32 %v315, %v315
    %v318 = vmul.f32 %v316, %v316
    %v319 = vadd.f32 %v317, %v318
    %320 = vadd.xlane.f32.xlu0 %v319
    %v321 = vpop.xlane.xlu0 %320
    %v322 = vmul.f32 %v321, %v313
    %v323 = vadd.f32 %v322, 1e-05
    %v324 = vrsqrt.pop %v323
    %v325 = vmul.f32 %v315, %v324
    %v326 = vmul.f32 %v316, %v324
    %v328 = vlaneseq
    %v329 = vshrl.u32 %v328, 7
    %v330 = vsub.s32 0, %v329
    %v331 = vrot.slane %v307, %v330
    %v332 = vlaneseq
    %v333 = vshrl.u32 %v332, 7
    %v334 = vsub.s32 1, %v333
    %v335 = vrot.slane %v307, %v334
    %v338 = vmul.f32 %v325, %v331
    %v339 = vmul.f32 %v326, %v335
    %v341 = vlaneseq
    %v342 = vshrl.u32 %v341, 7
    %v343 = vsub.s32 0, %v342
    %v344 = vrot.slane %v309, %v343
    %v345 = vlaneseq
    %v346 = vshrl.u32 %v345, 7
    %v347 = vsub.s32 1, %v346
    %v348 = vrot.slane %v309, %v347
    %v351 = vadd.f32 %v338, %v344
    %v352 = vadd.f32 %v339, %v348
    %v353 = vmax.f32 %v351, 0.0
    %v354 = vmax.f32 %v352, 0.0
    %v355 = vld [vmem:[#allocation2] sm:$0xff]
    %v356 = vld [vmem:[#allocation2 + $0x8] sm:$0xff]
    %v357 = vld [vmem:[#allocation2 + $0x10] sm:$0xff]
    %v358 = vld [vmem:[#allocation2 + $0x18] sm:$0xff]
    %v359 = vld [vmem:[#allocation2 + $0x20] sm:$0xff]
    %v360 = vld [vmem:[#allocation2 + $0x28] sm:$0xff]
    %v361 = vld [vmem:[#allocation2 + $0x30] sm:$0xff]
    %v362 = vld [vmem:[#allocation2 + $0x38] sm:$0xff]
    %v363 = vld [vmem:[#allocation2 + $0x40] sm:$0xff]
    %v364 = vld [vmem:[#allocation2 + $0x48] sm:$0xff]
    %v365 = vld [vmem:[#allocation2 + $0x50] sm:$0xff]
    %v366 = vld [vmem:[#allocation2 + $0x58] sm:$0xff]
    %v367 = vld [vmem:[#allocation2 + $0x60] sm:$0xff]
    %v368 = vld [vmem:[#allocation2 + $0x68] sm:$0xff]
    %v369 = vld [vmem:[#allocation2 + $0x70] sm:$0xff]
    %v370 = vld [vmem:[#allocation2 + $0x78] sm:$0xff]
    %v371 = vld [vmem:[#allocation2 + $0x80] sm:$0xff]
    %v372 = vld [vmem:[#allocation2 + $0x88] sm:$0xff]
    %v373 = vld [vmem:[#allocation2 + $0x90] sm:$0xff]
    %v374 = vld [vmem:[#allocation2 + $0x98] sm:$0xff]
    %v375 = vld [vmem:[#allocation2 + $0xa0] sm:$0xff]
    %v376 = vld [vmem:[#allocation2 + $0xa8] sm:$0xff]
    %v377 = vld [vmem:[#allocation2 + $0xb0] sm:$0xff]
    %v378 = vld [vmem:[#allocation2 + $0xb8] sm:$0xff]
    %v379 = vld [vmem:[#allocation2 + $0xc0] sm:$0xff]
    %v380 = vld [vmem:[#allocation2 + $0xc8] sm:$0xff]
    %v381 = vld [vmem:[#allocation2 + $0xd0] sm:$0xff]
    %v382 = vld [vmem:[#allocation2 + $0xd8] sm:$0xff]
    %v383 = vld [vmem:[#allocation2 + $0xe0] sm:$0xff]
    %v384 = vld [vmem:[#allocation2 + $0xe8] sm:$0xff]
    %v385 = vld [vmem:[#allocation2 + $0xf0] sm:$0xff]
    %v386 = vld [vmem:[#allocation2 + $0xf8] sm:$0xff]
    %v387 = vld [vmem:[#allocation2 + $0x100] sm:$0xff]
    %v388 = vld [vmem:[#allocation2 + $0x108] sm:$0xff]
    %v389 = vld [vmem:[#allocation2 + $0x110] sm:$0xff]
    %v390 = vld [vmem:[#allocation2 + $0x118] sm:$0xff]
    %v391 = vld [vmem:[#allocation2 + $0x120] sm:$0xff]
    %v392 = vld [vmem:[#allocation2 + $0x128] sm:$0xff]
    %v393 = vld [vmem:[#allocation2 + $0x130] sm:$0xff]
    %v394 = vld [vmem:[#allocation2 + $0x138] sm:$0xff]
    %v395 = vld [vmem:[#allocation2 + $0x140] sm:$0xff]
    %v396 = vld [vmem:[#allocation2 + $0x148] sm:$0xff]
    %v397 = vld [vmem:[#allocation2 + $0x150] sm:$0xff]
    %v398 = vld [vmem:[#allocation2 + $0x158] sm:$0xff]
    %v399 = vld [vmem:[#allocation2 + $0x160] sm:$0xff]
    %v400 = vld [vmem:[#allocation2 + $0x168] sm:$0xff]
    %v401 = vld [vmem:[#allocation2 + $0x170] sm:$0xff]
    %v402 = vld [vmem:[#allocation2 + $0x178] sm:$0xff]
    %v403 = vld [vmem:[#allocation2 + $0x180] sm:$0xff]
    %v404 = vld [vmem:[#allocation2 + $0x188] sm:$0xff]
    %v405 = vld [vmem:[#allocation2 + $0x190] sm:$0xff]
    %v406 = vld [vmem:[#allocation2 + $0x198] sm:$0xff]
    %v407 = vld [vmem:[#allocation2 + $0x1a0] sm:$0xff]
    %v408 = vld [vmem:[#allocation2 + $0x1a8] sm:$0xff]
    %v409 = vld [vmem:[#allocation2 + $0x1b0] sm:$0xff]
    %v410 = vld [vmem:[#allocation2 + $0x1b8] sm:$0xff]
    %v411 = vld [vmem:[#allocation2 + $0x1c0] sm:$0xff]
    %v412 = vld [vmem:[#allocation2 + $0x1c8] sm:$0xff]
    %v413 = vld [vmem:[#allocation2 + $0x1d0] sm:$0xff]
    %v414 = vld [vmem:[#allocation2 + $0x1d8] sm:$0xff]
    %v415 = vld [vmem:[#allocation2 + $0x1e0] sm:$0xff]
    %v416 = vld [vmem:[#allocation2 + $0x1e8] sm:$0xff]
    %v417 = vld [vmem:[#allocation2 + $0x1f0] sm:$0xff]
    %v418 = vld [vmem:[#allocation2 + $0x1f8] sm:$0xff]
    %s419 = scalar_lea.vmem %s4, 3
    %v420 = vld [vmem:[%s419] ss:$8 sm:$0x3]
    %v422 = vlaneseq
    %v423 = vshrl.u32 %v422, 7
    %v424 = vsub.s32 0, %v423
    %v425 = vrot.slane %v420, %v424
    %v426 = vlaneseq
    %v427 = vshrl.u32 %v426, 7
    %v428 = vsub.s32 1, %v427
    %v429 = vrot.slane %v420, %v428
    %432 = vmatprep.subr.mxu0 %v356
    %433 = vmatpush1.msra.mxu0 %v355
    %434 = vmatprep.subr.mxu0 %v358
    %435 = vmatpush1.msra.mxu0 %v357
    %436 = vmatprep.subr.mxu0 %v360
    %437 = vmatpush1.msra.mxu0 %v359
    %438 = vmatprep.subr.mxu0 %v362
    %439 = vmatpush1.msra.mxu0 %v361
    %440 = vmatprep.subr.mxu0 %v364
    %441 = vmatpush1.msra.mxu0 %v363
    %442 = vmatprep.subr.mxu0 %v366
    %443 = vmatpush1.msra.mxu0 %v365
    %444 = vmatprep.subr.mxu0 %v368
    %445 = vmatpush1.msra.mxu0 %v367
    %446 = vmatprep.subr.mxu0 %v370
    %447 = vmatpush1.msra.mxu0 %v369
    %448 = vmatprep.subr.mxu0 %v372
    %449 = vmatpush1.msra.mxu0 %v371
    %450 = vmatprep.subr.mxu0 %v374
    %451 = vmatpush1.msra.mxu0 %v373
    %452 = vmatprep.subr.mxu0 %v376
    %453 = vmatpush1.msra.mxu0 %v375
    %454 = vmatprep.subr.mxu0 %v378
    %455 = vmatpush1.msra.mxu0 %v377
    %456 = vmatprep.subr.mxu0 %v380
    %457 = vmatpush1.msra.mxu0 %v379
    %458 = vmatprep.subr.mxu0 %v382
    %459 = vmatpush1.msra.mxu0 %v381
    %460 = vmatprep.subr.mxu0 %v384
    %461 = vmatpush1.msra.mxu0 %v383
    %462 = vmatprep.subr.mxu0 %v386
    %463 = vmatpush1.msra.mxu0 %v385
    %464 = vmatprep.subr.mxu0 %v388
    %465 = vmatpush1.msra.mxu0 %v387
    %466 = vmatprep.subr.mxu0 %v390
    %467 = vmatpush1.msra.mxu0 %v389
    %468 = vmatprep.subr.mxu0 %v392
    %469 = vmatpush1.msra.mxu0 %v391
    %470 = vmatprep.subr.mxu0 %v394
    %471 = vmatpush1.msra.mxu0 %v393
    %472 = vmatprep.subr.mxu0 %v396
    %473 = vmatpush1.msra.mxu0 %v395
    %474 = vmatprep.subr.mxu0 %v398
    %475 = vmatpush1.msra.mxu0 %v397
    %476 = vmatprep.subr.mxu0 %v400
    %477 = vmatpush1.msra.mxu0 %v399
    %478 = vmatprep.subr.mxu0 %v402
    %479 = vmatpush1.msra.mxu0 %v401
    %480 = vmatprep.subr.mxu0 %v404
    %481 = vmatpush1.msra.mxu0 %v403
    %482 = vmatprep.subr.mxu0 %v406
    %483 = vmatpush1.msra.mxu0 %v405
    %484 = vmatprep.subr.mxu0 %v408
    %485 = vmatpush1.msra.mxu0 %v407
    %486 = vmatprep.subr.mxu0 %v410
    %487 = vmatpush1.msra.mxu0 %v409
    %488 = vmatprep.subr.mxu0 %v412
    %489 = vmatpush1.msra.mxu0 %v411
    %490 = vmatprep.subr.mxu0 %v414
    %491 = vmatpush1.msra.mxu0 %v413
    %492 = vmatprep.subr.mxu0 %v416
    %493 = vmatpush1.msra.mxu0 %v415
    %494 = vmatprep.subr.mxu0 %v418
    %495 = vmatpush1.msra.mxu0 %v417
    %496 = vmatprep.mubr.f32.mxu0 %v354
    %497 = vmatmul.mubr.f32.gmra.mrb[0].mxu0 %v353
    %v498 = vpop.f32.mrb[0].mxu0
    %v499 = vadd.f32 %v425, %v498
    %v500 = vpop.f32.mrb[0].mxu0
    %v501 = vadd.f32 %v429, %v500
    %502 = vdwg.mxu0
    %s503 = scalar_lea.vmem %s4, 4
    %v504 = vld [vmem:[%s503] ss:$8 sm:$0x3]
    %s505 = scalar_lea.vmem %s4, 5
    %v506 = vld [vmem:[%s505] ss:$8 sm:$0x3]
    %v507 = vadd.f32 %v499, %v501
    %508 = vadd.xlane.f32.xlu0 %v507
    %v509 = vpop.xlane.xlu0 %508
    %v510 = vmul.f32 %v509, %v313
    %v511 = vsub.f32 %v499, %v510
    %v512 = vsub.f32 %v501, %v510
    %v513 = vmul.f32 %v511, %v511
    %v514 = vmul.f32 %v512, %v512
    %v515 = vadd.f32 %v513, %v514
    %516 = vadd.xlane.f32.xlu0 %v515
    %v517 = vpop.xlane.xlu0 %516
    %v518 = vmul.f32 %v517, %v313
    %v519 = vadd.f32 %v518, 1e-05
    %v520 = vrsqrt.pop %v519
    %v521 = vmul.f32 %v511, %v520
    %v522 = vmul.f32 %v512, %v520
    %v524 = vlaneseq
    %v525 = vshrl.u32 %v524, 7
    %v526 = vsub.s32 0, %v525
    %v527 = vrot.slane %v504, %v526
    %v528 = vlaneseq
    %v529 = vshrl.u32 %v528, 7
    %v530 = vsub.s32 1, %v529
    %v531 = vrot.slane %v504, %v530
    %v534 = vmul.f32 %v521, %v527
    %v535 = vmul.f32 %v522, %v531
    %v537 = vlaneseq
    %v538 = vshrl.u32 %v537, 7
    %v539 = vsub.s32 0, %v538
    %v540 = vrot.slane %v506, %v539
    %v541 = vlaneseq
    %v542 = vshrl.u32 %v541, 7
    %v543 = vsub.s32 1, %v542
    %v544 = vrot.slane %v506, %v543
    %v547 = vadd.f32 %v534, %v540
    %v548 = vadd.f32 %v535, %v544
    %v549 = vmax.f32 %v547, 0.0
    %v550 = vmax.f32 %v548, 0.0
    %v551 = vld [vmem:[#allocation4] sm:$0xff]
    %v552 = vld [vmem:[#allocation4 + $0x8] sm:$0xff]
    %v553 = vld [vmem:[#allocation4 + $0x10] sm:$0xff]
    %v554 = vld [vmem:[#allocation4 + $0x18] sm:$0xff]
    %v555 = vld [vmem:[#allocation4 + $0x20] sm:$0xff]
    %v556 = vld [vmem:[#allocation4 + $0x28] sm:$0xff]
    %v557 = vld [vmem:[#allocation4 + $0x30] sm:$0xff]
    %v558 = vld [vmem:[#allocation4 + $0x38] sm:$0xff]
    %v559 = vld [vmem:[#allocation4 + $0x40] sm:$0xff]
    %v560 = vld [vmem:[#allocation4 + $0x48] sm:$0xff]
    %v561 = vld [vmem:[#allocation4 + $0x50] sm:$0xff]
    %v562 = vld [vmem:[#allocation4 + $0x58] sm:$0xff]
    %v563 = vld [vmem:[#allocation4 + $0x60] sm:$0xff]
    %v564 = vld [vmem:[#allocation4 + $0x68] sm:$0xff]
    %v565 = vld [vmem:[#allocation4 + $0x70] sm:$0xff]
    %v566 = vld [vmem:[#allocation4 + $0x78] sm:$0xff]
    %v567 = vld [vmem:[#allocation4 + $0x80] sm:$0xff]
    %v568 = vld [vmem:[#allocation4 + $0x88] sm:$0xff]
    %v569 = vld [vmem:[#allocation4 + $0x90] sm:$0xff]
    %v570 = vld [vmem:[#allocation4 + $0x98] sm:$0xff]
    %v571 = vld [vmem:[#allocation4 + $0xa0] sm:$0xff]
    %v572 = vld [vmem:[#allocation4 + $0xa8] sm:$0xff]
    %v573 = vld [vmem:[#allocation4 + $0xb0] sm:$0xff]
    %v574 = vld [vmem:[#allocation4 + $0xb8] sm:$0xff]
    %v575 = vld [vmem:[#allocation4 + $0xc0] sm:$0xff]
    %v576 = vld [vmem:[#allocation4 + $0xc8] sm:$0xff]
    %v577 = vld [vmem:[#allocation4 + $0xd0] sm:$0xff]
    %v578 = vld [vmem:[#allocation4 + $0xd8] sm:$0xff]
    %v579 = vld [vmem:[#allocation4 + $0xe0] sm:$0xff]
    %v580 = vld [vmem:[#allocation4 + $0xe8] sm:$0xff]
    %v581 = vld [vmem:[#allocation4 + $0xf0] sm:$0xff]
    %v582 = vld [vmem:[#allocation4 + $0xf8] sm:$0xff]
    %v583 = vld [vmem:[#allocation4 + $0x100] sm:$0xff]
    %v584 = vld [vmem:[#allocation4 + $0x108] sm:$0xff]
    %v585 = vld [vmem:[#allocation4 + $0x110] sm:$0xff]
    %v586 = vld [vmem:[#allocation4 + $0x118] sm:$0xff]
    %v587 = vld [vmem:[#allocation4 + $0x120] sm:$0xff]
    %v588 = vld [vmem:[#allocation4 + $0x128] sm:$0xff]
    %v589 = vld [vmem:[#allocation4 + $0x130] sm:$0xff]
    %v590 = vld [vmem:[#allocation4 + $0x138] sm:$0xff]
    %v591 = vld [vmem:[#allocation4 + $0x140] sm:$0xff]
    %v592 = vld [vmem:[#allocation4 + $0x148] sm:$0xff]
    %v593 = vld [vmem:[#allocation4 + $0x150] sm:$0xff]
    %v594 = vld [vmem:[#allocation4 + $0x158] sm:$0xff]
    %v595 = vld [vmem:[#allocation4 + $0x160] sm:$0xff]
    %v596 = vld [vmem:[#allocation4 + $0x168] sm:$0xff]
    %v597 = vld [vmem:[#allocation4 + $0x170] sm:$0xff]
    %v598 = vld [vmem:[#allocation4 + $0x178] sm:$0xff]
    %v599 = vld [vmem:[#allocation4 + $0x180] sm:$0xff]
    %v600 = vld [vmem:[#allocation4 + $0x188] sm:$0xff]
    %v601 = vld [vmem:[#allocation4 + $0x190] sm:$0xff]
    %v602 = vld [vmem:[#allocation4 + $0x198] sm:$0xff]
    %v603 = vld [vmem:[#allocation4 + $0x1a0] sm:$0xff]
    %v604 = vld [vmem:[#allocation4 + $0x1a8] sm:$0xff]
    %v605 = vld [vmem:[#allocation4 + $0x1b0] sm:$0xff]
    %v606 = vld [vmem:[#allocation4 + $0x1b8] sm:$0xff]
    %v607 = vld [vmem:[#allocation4 + $0x1c0] sm:$0xff]
    %v608 = vld [vmem:[#allocation4 + $0x1c8] sm:$0xff]
    %v609 = vld [vmem:[#allocation4 + $0x1d0] sm:$0xff]
    %v610 = vld [vmem:[#allocation4 + $0x1d8] sm:$0xff]
    %v611 = vld [vmem:[#allocation4 + $0x1e0] sm:$0xff]
    %v612 = vld [vmem:[#allocation4 + $0x1e8] sm:$0xff]
    %v613 = vld [vmem:[#allocation4 + $0x1f0] sm:$0xff]
    %v614 = vld [vmem:[#allocation4 + $0x1f8] sm:$0xff]
    %s615 = scalar_lea.vmem %s4, 6
    %v616 = vld [vmem:[%s615] ss:$8 sm:$0x3]
    %v618 = vlaneseq
    %v619 = vshrl.u32 %v618, 7
    %v620 = vsub.s32 0, %v619
    %v621 = vrot.slane %v616, %v620
    %v622 = vlaneseq
    %v623 = vshrl.u32 %v622, 7
    %v624 = vsub.s32 1, %v623
    %v625 = vrot.slane %v616, %v624
    %628 = vmatprep.subr.mxu0 %v552
    %629 = vmatpush1.msra.mxu0 %v551
    %630 = vmatprep.subr.mxu0 %v554
    %631 = vmatpush1.msra.mxu0 %v553
    %632 = vmatprep.subr.mxu0 %v556
    %633 = vmatpush1.msra.mxu0 %v555
    %634 = vmatprep.subr.mxu0 %v558
    %635 = vmatpush1.msra.mxu0 %v557
    %636 = vmatprep.subr.mxu0 %v560
    %637 = vmatpush1.msra.mxu0 %v559
    %638 = vmatprep.subr.mxu0 %v562
    %639 = vmatpush1.msra.mxu0 %v561
    %640 = vmatprep.subr.mxu0 %v564
    %641 = vmatpush1.msra.mxu0 %v563
    %642 = vmatprep.subr.mxu0 %v566
    %643 = vmatpush1.msra.mxu0 %v565
    %644 = vmatprep.subr.mxu0 %v568
    %645 = vmatpush1.msra.mxu0 %v567
    %646 = vmatprep.subr.mxu0 %v570
    %647 = vmatpush1.msra.mxu0 %v569
    %648 = vmatprep.subr.mxu0 %v572
    %649 = vmatpush1.msra.mxu0 %v571
    %650 = vmatprep.subr.mxu0 %v574
    %651 = vmatpush1.msra.mxu0 %v573
    %652 = vmatprep.subr.mxu0 %v576
    %653 = vmatpush1.msra.mxu0 %v575
    %654 = vmatprep.subr.mxu0 %v578
    %655 = vmatpush1.msra.mxu0 %v577
    %656 = vmatprep.subr.mxu0 %v580
    %657 = vmatpush1.msra.mxu0 %v579
    %658 = vmatprep.subr.mxu0 %v582
    %659 = vmatpush1.msra.mxu0 %v581
    %660 = vmatprep.subr.mxu0 %v584
    %661 = vmatpush1.msra.mxu0 %v583
    %662 = vmatprep.subr.mxu0 %v586
    %663 = vmatpush1.msra.mxu0 %v585
    %664 = vmatprep.subr.mxu0 %v588
    %665 = vmatpush1.msra.mxu0 %v587
    %666 = vmatprep.subr.mxu0 %v590
    %667 = vmatpush1.msra.mxu0 %v589
    %668 = vmatprep.subr.mxu0 %v592
    %669 = vmatpush1.msra.mxu0 %v591
    %670 = vmatprep.subr.mxu0 %v594
    %671 = vmatpush1.msra.mxu0 %v593
    %672 = vmatprep.subr.mxu0 %v596
    %673 = vmatpush1.msra.mxu0 %v595
    %674 = vmatprep.subr.mxu0 %v598
    %675 = vmatpush1.msra.mxu0 %v597
    %676 = vmatprep.subr.mxu0 %v600
    %677 = vmatpush1.msra.mxu0 %v599
    %678 = vmatprep.subr.mxu0 %v602
    %679 = vmatpush1.msra.mxu0 %v601
    %680 = vmatprep.subr.mxu0 %v604
    %681 = vmatpush1.msra.mxu0 %v603
    %682 = vmatprep.subr.mxu0 %v606
    %683 = vmatpush1.msra.mxu0 %v605
    %684 = vmatprep.subr.mxu0 %v608
    %685 = vmatpush1.msra.mxu0 %v607
    %686 = vmatprep.subr.mxu0 %v610
    %687 = vmatpush1.msra.mxu0 %v609
    %688 = vmatprep.subr.mxu0 %v612
    %689 = vmatpush1.msra.mxu0 %v611
    %690 = vmatprep.subr.mxu0 %v614
    %691 = vmatpush1.msra.mxu0 %v613
    %692 = vmatprep.mubr.f32.mxu0 %v550
    %693 = vmatmul.mubr.f32.gmra.mrb[0].mxu0 %v549
    %v694 = vpop.f32.mrb[0].mxu0
    %v695 = vadd.f32 %v621, %v694
    %v696 = vpop.f32.mrb[0].mxu0
    %v697 = vadd.f32 %v625, %v696
    %698 = vdwg.mxu0
    %s699 = scalar_lea.vmem %s4, 7
    %v700 = vld [vmem:[%s699] ss:$8 sm:$0x3]
    %s701 = scalar_lea.vmem %s4, 16
    %v702 = vld [vmem:[%s701] ss:$8 sm:$0x3]
    %v703 = vadd.f32 %v695, %v697
    %704 = vadd.xlane.f32.xlu0 %v703
    %v705 = vpop.xlane.xlu0 %704
    %v706 = vmul.f32 %v705, %v313
    %v707 = vsub.f32 %v695, %v706
    %v708 = vsub.f32 %v697, %v706
    %v709 = vmul.f32 %v707, %v707
    %v710 = vmul.f32 %v708, %v708
    %v711 = vadd.f32 %v709, %v710
    %712 = vadd.xlane.f32.xlu0 %v711
    %v713 = vpop.xlane.xlu0 %712
    %v714 = vmul.f32 %v713, %v313
    %v715 = vadd.f32 %v714, 1e-05
    %v716 = vrsqrt.pop %v715
    %v717 = vmul.f32 %v707, %v716
    %v718 = vmul.f32 %v708, %v716
    %v720 = vlaneseq
    %v721 = vshrl.u32 %v720, 7
    %v722 = vsub.s32 0, %v721
    %v723 = vrot.slane %v700, %v722
    %v724 = vlaneseq
    %v725 = vshrl.u32 %v724, 7
    %v726 = vsub.s32 1, %v725
    %v727 = vrot.slane %v700, %v726
    %v730 = vmul.f32 %v717, %v723
    %v731 = vmul.f32 %v718, %v727
    %v733 = vlaneseq
    %v734 = vshrl.u32 %v733, 7
    %v735 = vsub.s32 0, %v734
    %v736 = vrot.slane %v702, %v735
    %v737 = vlaneseq
    %v738 = vshrl.u32 %v737, 7
    %v739 = vsub.s32 1, %v738
    %v740 = vrot.slane %v702, %v739
    %v743 = vadd.f32 %v730, %v736
    %v744 = vadd.f32 %v731, %v740
    %v745 = vmax.f32 %v743, 0.0
    %v746 = vmax.f32 %v744, 0.0
    %v747 = vld [vmem:[%s8] sm:$0xff]
    %v748 = vld [vmem:[%s8 + $0x8] sm:$0xff]
    %v749 = vld [vmem:[%s8 + $0x10] sm:$0xff]
    %v750 = vld [vmem:[%s8 + $0x18] sm:$0xff]
    %v751 = vld [vmem:[%s8 + $0x20] sm:$0xff]
    %v752 = vld [vmem:[%s8 + $0x28] sm:$0xff]
    %v753 = vld [vmem:[%s8 + $0x30] sm:$0xff]
    %v754 = vld [vmem:[%s8 + $0x38] sm:$0xff]
    %v755 = vld [vmem:[%s8 + $0x40] sm:$0xff]
    %v756 = vld [vmem:[%s8 + $0x48] sm:$0xff]
    %v757 = vld [vmem:[%s8 + $0x50] sm:$0xff]
    %v758 = vld [vmem:[%s8 + $0x58] sm:$0xff]
    %v759 = vld [vmem:[%s8 + $0x60] sm:$0xff]
    %v760 = vld [vmem:[%s8 + $0x68] sm:$0xff]
    %v761 = vld [vmem:[%s8 + $0x70] sm:$0xff]
    %v762 = vld [vmem:[%s8 + $0x78] sm:$0xff]
    %v763 = vld [vmem:[%s8 + $0x80] sm:$0xff]
    %v764 = vld [vmem:[%s8 + $0x88] sm:$0xff]
    %v765 = vld [vmem:[%s8 + $0x90] sm:$0xff]
    %v766 = vld [vmem:[%s8 + $0x98] sm:$0xff]
    %v767 = vld [vmem:[%s8 + $0xa0] sm:$0xff]
    %v768 = vld [vmem:[%s8 + $0xa8] sm:$0xff]
    %v769 = vld [vmem:[%s8 + $0xb0] sm:$0xff]
    %v770 = vld [vmem:[%s8 + $0xb8] sm:$0xff]
    %v771 = vld [vmem:[%s8 + $0xc0] sm:$0xff]
    %v772 = vld [vmem:[%s8 + $0xc8] sm:$0xff]
    %v773 = vld [vmem:[%s8 + $0xd0] sm:$0xff]
    %v774 = vld [vmem:[%s8 + $0xd8] sm:$0xff]
    %v775 = vld [vmem:[%s8 + $0xe0] sm:$0xff]
    %v776 = vld [vmem:[%s8 + $0xe8] sm:$0xff]
    %v777 = vld [vmem:[%s8 + $0xf0] sm:$0xff]
    %v778 = vld [vmem:[%s8 + $0xf8] sm:$0xff]
    %v779 = vld [vmem:[%s9] sm:$0x1]
    %v781 = vlaneseq
    %v782 = vshrl.u32 %v781, 7
    %v783 = vsub.s32 0, %v782
    %v784 = vrot.slane %v779, %v783
    %786 = vmatprep.subr.mxu0 0.0
    %787 = vmatpush1.msra.mxu0 %v747
    %788 = vmatprep.subr.mxu0 0.0
    %789 = vmatpush1.msra.mxu0 %v748
    %790 = vmatprep.subr.mxu0 0.0
    %791 = vmatpush1.msra.mxu0 %v749
    %792 = vmatprep.subr.mxu0 0.0
    %793 = vmatpush1.msra.mxu0 %v750
    %794 = vmatprep.subr.mxu0 0.0
    %795 = vmatpush1.msra.mxu0 %v751
    %796 = vmatprep.subr.mxu0 0.0
    %797 = vmatpush1.msra.mxu0 %v752
    %798 = vmatprep.subr.mxu0 0.0
    %799 = vmatpush1.msra.mxu0 %v753
    %800 = vmatprep.subr.mxu0 0.0
    %801 = vmatpush1.msra.mxu0 %v754
    %802 = vmatprep.subr.mxu0 0.0
    %803 = vmatpush1.msra.mxu0 %v755
    %804 = vmatprep.subr.mxu0 0.0
    %805 = vmatpush1.msra.mxu0 %v756
    %806 = vmatprep.subr.mxu0 0.0
    %807 = vmatpush1.msra.mxu0 %v757
    %808 = vmatprep.subr.mxu0 0.0
    %809 = vmatpush1.msra.mxu0 %v758
    %810 = vmatprep.subr.mxu0 0.0
    %811 = vmatpush1.msra.mxu0 %v759
    %812 = vmatprep.subr.mxu0 0.0
    %813 = vmatpush1.msra.mxu0 %v760
    %814 = vmatprep.subr.mxu0 0.0
    %815 = vmatpush1.msra.mxu0 %v761
    %816 = vmatprep.subr.mxu0 0.0
    %817 = vmatpush1.msra.mxu0 %v762
    %818 = vmatprep.subr.mxu0 0.0
    %819 = vmatpush1.msra.mxu0 %v763
    %820 = vmatprep.subr.mxu0 0.0
    %821 = vmatpush1.msra.mxu0 %v764
    %822 = vmatprep.subr.mxu0 0.0
    %823 = vmatpush1.msra.mxu0 %v765
    %824 = vmatprep.subr.mxu0 0.0
    %825 = vmatpush1.msra.mxu0 %v766
    %826 = vmatprep.subr.mxu0 0.0
    %827 = vmatpush1.msra.mxu0 %v767
    %828 = vmatprep.subr.mxu0 0.0
    %829 = vmatpush1.msra.mxu0 %v768
    %830 = vmatprep.subr.mxu0 0.0
    %831 = vmatpush1.msra.mxu0 %v769
    %832 = vmatprep.subr.mxu0 0.0
    %833 = vmatpush1.msra.mxu0 %v770
    %834 = vmatprep.subr.mxu0 0.0
    %835 = vmatpush1.msra.mxu0 %v771
    %836 = vmatprep.subr.mxu0 0.0
    %837 = vmatpush1.msra.mxu0 %v772
    %838 = vmatprep.subr.mxu0 0.0
    %839 = vmatpush1.msra.mxu0 %v773
    %840 = vmatprep.subr.mxu0 0.0
    %841 = vmatpush1.msra.mxu0 %v774
    %842 = vmatprep.subr.mxu0 0.0
    %843 = vmatpush1.msra.mxu0 %v775
    %844 = vmatprep.subr.mxu0 0.0
    %845 = vmatpush1.msra.mxu0 %v776
    %846 = vmatprep.subr.mxu0 0.0
    %847 = vmatpush1.msra.mxu0 %v777
    %848 = vmatprep.subr.mxu0 0.0
    %849 = vmatpush1.msra.mxu0 %v778
    %850 = vmatprep.mubr.f32.mxu0 %v746
    %851 = vmatmul.mubr.f32.gmra.mrb[0].mxu0 %v745
    %v852 = vpop.f32.mrb[0].mxu0
    %v853 = vadd.f32 %v784, %v852
    %v854 = vpop.f32.mrb[0].mxu0
    %855 = vdwg.mxu0
    %vm856 = vcmask 23552
    %857 = vst.msk [vmem:[%s10] sm:$0xff] %vm856, %v853
    // Predicated region
    $region50: #{_forward_impl.1} parent=1 // pred_check
      _
    $region51: #{_forward_impl.1} parent=1 // pred_check_branch
      %859 = sbr.rel (0) target = $region53
    $region52: #{_forward_impl.1} parent=1 // pred_region
      _
    $region53: #{_forward_impl.1} parent=1 // pred_fallthru
      _
    // Predicated region
    $region54: #{_forward_impl.1} parent=1 // pred_check
      _
    $region55: #{_forward_impl.1} parent=1 // pred_check_branch
      %861 = sbr.rel (0) target = $region57
    $region56: #{_forward_impl.1} parent=1 // pred_region
      _
    $region57: #{_forward_impl.1} parent=1 // pred_fallthru
      _
    %862 = vsyncpa [#allocation3], 1
    %863 = vsyncpa [#allocation5], 1

</llo_original>
